<compile_context>
chip_gen: v7x
topology: tpu7x:2x2x1
jax: 0.10.0
libtpu: 0.0.40
codegen_flags: <defaults>
</compile_context>

<pallas_src>
import jax
import jax.numpy as jnp
from jax.experimental import pallas as pl
from jax.experimental.pallas import tpu as pltpu

D_MODEL = 64
HEAD_SIZE = 32


def attention_head_kernel(x_ref, wqkv_ref, bqkv_ref, o_ref):
    # x_ref: (Bt, S, D) in MXU dtype (bf16); wqkv_ref: (D, 3H) bf16;
    # bqkv_ref: (1, 3H) f32; o_ref: (Bt, S*H) output dtype.
    Bt, S, D = x_ref.shape
    H3 = wqkv_ref.shape[1]
    H = H3 // 3

    # Fused Q/K/V projection over ALL Bt*S rows at once (one MXU sequence,
    # better row occupancy than a per-batch-element dot_general).
    x2d = x_ref[...].reshape(Bt * S, D)                       # (Bt*S, D)
    qkv = jnp.dot(x2d, wqkv_ref[...],
                  preferred_element_type=jnp.float32)         # f32 accumulate
    qkv = qkv + bqkv_ref[...]                                 # (1,3H) broadcast
    qkv = qkv.reshape(Bt, S, H3).astype(x_ref.dtype)          # back to bf16 for MXU

    # NOTE: each 32-lane slice of the 96-lane qkv may materialize a small
    # sub-vreg copy; negligible at S=8 (perf review audit item).
    q = qkv[:, :, :H]            # 1/sqrt(H) already folded into Wq/bq
    k = qkv[:, :, H:2 * H]
    v = qkv[:, :, 2 * H:]

    # Attention scores, contracting on H (dot_general trans-B, no explicit
    # k transpose).
    scores = jnp.einsum('bqh,bkh->bqk', q, k,
                        preferred_element_type=jnp.float32)   # (Bt, S, S) f32

    # Numerically stable softmax over keys, kept in f32 (v5e-safe).
    m = jnp.max(scores, axis=-1, keepdims=True)
    p = jnp.exp(scores - m)
    denom = jnp.sum(p, axis=-1, keepdims=True)
    probs = p * pl.reciprocal(denom, approx=False)            # exact normalization

    out = jnp.einsum('bqk,bkh->bqh', probs.astype(v.dtype), v,
                     preferred_element_type=jnp.float32)      # (Bt, S, H) f32

    # Lane-dense store: last dim S*H (=256) is a multiple of 128 -> unmasked vst.
    o_ref[...] = out.reshape(Bt, S * H).astype(o_ref.dtype)


def attention_head(x, wq, bq, wk, bk, wv, bv, *, block_b=None,
                   mxu_dtype=jnp.bfloat16):
    """x: (B, S, D); w*: (D, H) (transposed vs nn.Linear); b*: (H,).
    Returns (B, S, H) in x.dtype."""
    B, S, D = x.shape
    H = wq.shape[1]
    scale = 1.0 / (H ** 0.5)
    out_dtype = x.dtype

    # Fuse Q/K/V; fold attention scale into Q's weight/bias in f32, then cast
    # matmul operands to the MXU dtype (bf16 halves DMA/VMEM bytes and uses
    # the bf16-native MXU on v6e/v7x; accumulation stays f32). Bias stays f32
    # (added after the f32 accumulate).
    wqkv = jnp.concatenate([wq * scale, wk, wv], axis=1).astype(mxu_dtype)   # (D, 3H)
    bqkv = jnp.concatenate([bq * scale, bk, bv]
                           ).reshape(1, 3 * H).astype(jnp.float32)           # (1, 3H)
    x_in = x.astype(mxu_dtype)

    if block_b is None:
        # One grid step by default: at small sizes the ~0.35us per-step
        # overhead dominates. Only shard the batch across grid steps (and
        # v7x's two TensorCores) when each step still keeps thousands of MXU
        # rows and the block stays (8,128)-tileable.
        block_b = B
        if B >= 16 and (B // 2) * S >= 4096 and (B // 2) % 8 == 0:
            block_b = B // 2
    assert B % block_b == 0
    grid_b = B // block_b

    bytes_accessed = (x_in.size * x_in.dtype.itemsize
                      + wqkv.size * wqkv.dtype.itemsize
                      + bqkv.size * bqkv.dtype.itemsize
                      + B * S * H * jnp.dtype(out_dtype).itemsize)
    cost = pl.CostEstimate(
        flops=2 * B * S * D * (3 * H) + 4 * B * S * S * H + 4 * B * S * S,
        transcendentals=B * S * S,
        bytes_accessed=bytes_accessed,
    )

    out_flat = pl.pallas_call(
        attention_head_kernel,
        out_shape=jax.ShapeDtypeStruct((B, S * H), out_dtype),
        grid=(grid_b,),
        in_specs=[
            pl.BlockSpec((block_b, S, D), lambda b: (b, 0, 0)),   # x
            pl.BlockSpec((D, 3 * H), lambda b: (0, 0)),           # fused W_qkv
            pl.BlockSpec((1, 3 * H), lambda b: (0, 0)),           # fused bias
        ],
        out_specs=pl.BlockSpec((block_b, S * H), lambda b: (b, 0)),
        compiler_params=pltpu.CompilerParams(
            dimension_semantics=("parallel",)),
        cost_estimate=cost,
    )(x_in, wqkv, bqkv)

    return out_flat.reshape(B, S, H)


def reference_attention_head(x, wq, bq, wk, bk, wv, bv):
    q = x @ wq + bq
    k = x @ wk + bk
    v = x @ wv + bv
    scores = (q @ jnp.swapaxes(k, -2, -1)) / (wq.shape[1] ** 0.5)
    probs = jax.nn.softmax(scores, axis=-1)
    return probs @ v


if __name__ == "__main__":
    B, S = 2, 8
    key = jax.random.PRNGKey(0)
    kx, kwq, kbq, kwk, kbk, kwv, kbv = jax.random.split(key, 7)

    x = jax.random.normal(kx, (B, S, D_MODEL), dtype=jnp.float32)

    # Deterministic parameter init (mimics nn.Linear's uniform init scale).
    limit = 1.0 / (D_MODEL ** 0.5)
    wq = jax.random.uniform(kwq, (D_MODEL, HEAD_SIZE), jnp.float32, -limit, limit)
    bq = jax.random.uniform(kbq, (HEAD_SIZE,), jnp.float32, -limit, limit)
    wk = jax.random.uniform(kwk, (D_MODEL, HEAD_SIZE), jnp.float32, -limit, limit)
    bk = jax.random.uniform(kbk, (HEAD_SIZE,), jnp.float32, -limit, limit)
    wv = jax.random.uniform(kwv, (D_MODEL, HEAD_SIZE), jnp.float32, -limit, limit)
    bv = jax.random.uniform(kbv, (HEAD_SIZE,), jnp.float32, -limit, limit)

    out = attention_head(x, wq, bq, wk, bk, wv, bv)
    out = jax.block_until_ready(out)

    ref = reference_attention_head(x, wq, bq, wk, bk, wv, bv)
    assert out.shape == (B, S, HEAD_SIZE)
    # Tolerance reflects bf16 MXU operands (f32 accumulation): observed error
    # is ~1e-3 absolute at these magnitudes; 2e-2 gives robust headroom.
    assert jnp.allclose(out, ref, atol=2e-2, rtol=2e-2), "mismatch vs reference"

    print("KERNEL_OK")
</pallas_src>

<mosaic_0001>
module attributes {stable_mosaic.version = 11 : i64} {
  func.func @attention_head_kernel(%arg0: i32, %arg1: memref<2x8x64xbf16, #tpu.memory_space<vmem>>, %arg2: memref<64x96xbf16, #tpu.memory_space<vmem>>, %arg3: memref<1x96xf32, #tpu.memory_space<vmem>>, %arg4: memref<2x256xf32, #tpu.memory_space<vmem>>) attributes {dimension_semantics = [#tpu.dimension_semantics<parallel>], iteration_bounds = array<i64: 1>, scalar_prefetch = 0 : i64, scratch_operands = 0 : i64, tpu.core_type = #tpu.core_type<tc>, window_params = [{transform_indices = @transform_0, window_bounds = array<i64: 2, 8, 64>}, {pipeline_mode = #tpu.pipeline_mode<synchronous>, transform_indices = @transform_1, window_bounds = array<i64: 64, 96>}, {pipeline_mode = #tpu.pipeline_mode<synchronous>, transform_indices = @transform_2, window_bounds = array<i64: 1, 96>}, {transform_indices = @transform_3, window_bounds = array<i64: 2, 256>}]} {
    %c0 = arith.constant 0 : index
    %c0_0 = arith.constant 0 : index
    %c0_1 = arith.constant 0 : index
    %0 = vector.load %arg1[%c0, %c0_0, %c0_1] : memref<2x8x64xbf16, #tpu.memory_space<vmem>>, vector<2x8x64xbf16>
    %1 = vector.shape_cast %0 : vector<2x8x64xbf16> to vector<16x64xbf16>
    %c0_2 = arith.constant 0 : index
    %c0_3 = arith.constant 0 : index
    %2 = vector.load %arg2[%c0_2, %c0_3] : memref<64x96xbf16, #tpu.memory_space<vmem>>, vector<64x96xbf16>
    %cst = arith.constant dense<0.000000e+00> : vector<16x96xf32>
    %3 = tpu.matmul %1, %2, %cst {dimension_numbers = #tpu.dot_dimension_numbers<[1], [0], [0], [1], [0, 0, 1, 1], [], []>} : vector<16x64xbf16>, vector<64x96xbf16>, vector<16x96xf32> -> vector<16x96xf32>
    %c0_4 = arith.constant 0 : index
    %c0_5 = arith.constant 0 : index
    %4 = vector.load %arg3[%c0_4, %c0_5] : memref<1x96xf32, #tpu.memory_space<vmem>>, vector<1x96xf32>
    %5 = vector.broadcast %4 : vector<1x96xf32> to vector<16x96xf32>
    %6 = arith.addf %3, %5 : vector<16x96xf32>
    %7 = vector.shape_cast %6 : vector<16x96xf32> to vector<2x8x96xf32>
    %8 = arith.truncf %7 : vector<2x8x96xf32> to vector<2x8x96xbf16>
    %9 = vector.extract_strided_slice %8 {offsets = [0, 0, 0], sizes = [2, 8, 32], strides = [1, 1, 1]} : vector<2x8x96xbf16> to vector<2x8x32xbf16>
    %10 = vector.extract_strided_slice %8 {offsets = [0, 0, 32], sizes = [2, 8, 32], strides = [1, 1, 1]} : vector<2x8x96xbf16> to vector<2x8x32xbf16>
    %11 = vector.extract_strided_slice %8 {offsets = [0, 0, 64], sizes = [2, 8, 32], strides = [1, 1, 1]} : vector<2x8x96xbf16> to vector<2x8x32xbf16>
    "tpu.trace_start"() <{level = 10 : i32, message = "bqh,bkh->bqk"}> : () -> ()
    %cst_6 = arith.constant dense<0.000000e+00> : vector<2x8x8xf32>
    %12 = tpu.matmul %9, %10, %cst_6 {dimension_numbers = #tpu.dot_dimension_numbers<[2], [2], [1], [1], [0, 0, 0, 1, 1, 1], [0], [0]>} : vector<2x8x32xbf16>, vector<2x8x32xbf16>, vector<2x8x8xf32> -> vector<2x8x8xf32>
    "tpu.trace_stop"() : () -> ()
    %cst_7 = arith.constant dense<0xFF800000> : vector<2x8xf32>
    %13 = vector.multi_reduction <maximumf>, %12, %cst_7 [2] : vector<2x8x8xf32> to vector<2x8xf32>
    %14 = vector.shape_cast %13 : vector<2x8xf32> to vector<2x8x1xf32>
    %15 = vector.broadcast %14 : vector<2x8x1xf32> to vector<2x8x8xf32>
    %16 = arith.subf %12, %15 : vector<2x8x8xf32>
    %17 = math.exp %16 : vector<2x8x8xf32>
    %cst_8 = arith.constant dense<0.000000e+00> : vector<2x8xf32>
    %18 = vector.multi_reduction <add>, %17, %cst_8 [2] : vector<2x8x8xf32> to vector<2x8xf32>
    %19 = vector.shape_cast %18 : vector<2x8xf32> to vector<2x8x1xf32>
    %20 = tpu.reciprocal %19 : vector<2x8x1xf32> -> vector<2x8x1xf32>
    %21 = vector.broadcast %20 : vector<2x8x1xf32> to vector<2x8x8xf32>
    %22 = arith.mulf %17, %21 : vector<2x8x8xf32>
    %23 = arith.truncf %22 : vector<2x8x8xf32> to vector<2x8x8xbf16>
    "tpu.trace_start"() <{level = 10 : i32, message = "bqk,bkh->bqh"}> : () -> ()
    %cst_9 = arith.constant dense<0.000000e+00> : vector<2x8x32xf32>
    %24 = tpu.matmul %23, %11, %cst_9 {dimension_numbers = #tpu.dot_dimension_numbers<[2], [1], [1], [2], [0, 0, 0, 1, 1, 2], [0], [0]>} : vector<2x8x8xbf16>, vector<2x8x32xbf16>, vector<2x8x32xf32> -> vector<2x8x32xf32>
    "tpu.trace_stop"() : () -> ()
    %25 = vector.shape_cast %24 : vector<2x8x32xf32> to vector<2x256xf32>
    %c0_10 = arith.constant 0 : index
    %c0_11 = arith.constant 0 : index
    %26 = vector.load %arg4[%c0_10, %c0_11] : memref<2x256xf32, #tpu.memory_space<vmem>>, vector<2x256xf32>
    tpu.vector_store %arg4[%c0_10, %c0_11], %25 {strides = array<i32>} : memref<2x256xf32, #tpu.memory_space<vmem>>, vector<2x256xf32>,
    return
  }
  func.func @transform_0(%arg0: i32) -> (i32, i32, i32) {
    %c0_i32 = arith.constant 0 : i32
    %c0_i32_0 = arith.constant 0 : i32
    %c0_i32_1 = arith.constant 0 : i32
    return %arg0, %c0_i32, %c0_i32_0 : i32, i32, i32
  }
  func.func @transform_1(%arg0: i32) -> (i32, i32) {
    %c0_i32 = arith.constant 0 : i32
    %c0_i32_0 = arith.constant 0 : i32
    %c0_i32_1 = arith.constant 0 : i32
    return %c0_i32, %c0_i32_0 : i32, i32
  }
  func.func @transform_2(%arg0: i32) -> (i32, i32) {
    %c0_i32 = arith.constant 0 : i32
    %c0_i32_0 = arith.constant 0 : i32
    %c0_i32_1 = arith.constant 0 : i32
    return %c0_i32, %c0_i32_0 : i32, i32
  }
  func.func @transform_3(%arg0: i32) -> (i32, i32) {
    %c0_i32 = arith.constant 0 : i32
    %c0_i32_0 = arith.constant 0 : i32
    return %arg0, %c0_i32 : i32, i32
  }
}

</mosaic_0001>

<llo_original>
// kernel: tpu_custom_call.1
$region0: #{tpu_custom_call.1}
  #allocation0 [shape = 'u32[]', space=smem, size = 0x4, offset = 0x4, fixed_abs, tag = 'smem constant byte address 0x4 - core index']
  #allocation1 [shape = 'u32[144,128]{1,0:T(1,128)}', space=vmem, size = 0x12000, scoped, tag = 'internal scratch']
  %s0 = inlined_call_operand.hbm [shape: bf16[2,8,64], index: 0, kind: input, shape index: {}]
  %s1 = inlined_call_operand.hbm [shape: bf16[64,96], index: 1, kind: input, shape index: {}]
  %s2 = inlined_call_operand.vmem [shape: f32[1,96], index: 2, kind: input, shape index: {}]
  %s3 = inlined_call_operand.hbm [shape: f32[2,256], index: 3, kind: output, shape index: {}]
  %s4 = sld [smem:[#allocation0]]
  $region30: #{tpu_custom_call.1} parent=0
    _
  %s6 = ssub.s32 1, %s4
  %s7 = scalar_select 0, %s6, %s4
  $region1: #{tpu_custom_call.1} parent=0
    #allocation2 [shape = 'u8[4096]{0}', space=vmem, size = 0x1000, scoped, tag = 'input window, operand 0, single buffered']
    #allocation3 [shape = 's32[1]{0}', space=sflag, size = 0x4, scoped, tag = 'scoped memory for tpu_custom_call.1']
    #allocation4 [shape = 's32[1]{0}', space=sflag, size = 0x4, scoped, tag = 'scoped memory for tpu_custom_call.1']
    #allocation5 [shape = 'u8[16384]{0}', space=vmem, size = 0x4000, scoped, tag = 'input window, operand 1, single buffered']
    #allocation6 [shape = 's32[1]{0}', space=sflag, size = 0x4, scoped, tag = 'scoped memory for tpu_custom_call.1']
    #allocation7 [shape = 'u8[2048]{0}', space=vmem, size = 0x800, scoped, tag = 'output window, operand 0, single buffered']
    %8 = vsyncpa [#allocation3], 0
    %9 = vsyncpa [#allocation6], 0
    %10 = vsyncpa [#allocation4], 0
    // Predicated region
    $region2: #{tpu_custom_call.1} parent=1 // pred_check
      _
    $region3: #{tpu_custom_call.1} parent=1 // pred_check_branch
      %12 = sbr.rel (0) target = $region5
    $region4: #{tpu_custom_call.1} parent=1 // pred_region
      %s14 = ssub.s32 128, 128
      %15 = vsyncadd [#allocation3], %s14
      %s16 = sshll.u32 [#allocation2], 4
      %s17 = int_to_ptr.vmem [resolvable:$true] %s16
      %22 = dma.hbm_to_vmem [thread:$0]  %s0, 128, %s17, [#allocation3], 64, 64, 4
    $region5: #{tpu_custom_call.1} parent=1 // pred_fallthru
      _
    // Predicated region
    $region6: #{tpu_custom_call.1} parent=1 // pred_check
      _
    $region7: #{tpu_custom_call.1} parent=1 // pred_check_branch
      %24 = sbr.rel (0) target = $region9
    $region8: #{tpu_custom_call.1} parent=1 // pred_region
      %s26 = ssub.s32 512, 512
      %27 = vsyncadd [#allocation6], %s26
      %s28 = sshll.u32 [#allocation5], 4
      %s29 = int_to_ptr.vmem [resolvable:$true] %s28
      %34 = dma.hbm_to_vmem [thread:$0]  %s1, 512, %s29, [#allocation6], 64, 64, 4
    $region9: #{tpu_custom_call.1} parent=1 // pred_fallthru
      _
    // Predicated region
    $region10: #{tpu_custom_call.1} parent=1 // pred_check
      _
    $region11: #{tpu_custom_call.1} parent=1 // pred_check_branch
      %36 = sbr.rel (0) target = $region13
    $region12: #{tpu_custom_call.1} parent=1 // pred_region
      _
    $region13: #{tpu_custom_call.1} parent=1 // pred_fallthru
      _
    // Predicated region
    $region14: #{tpu_custom_call.1} parent=1 // pred_check
      _
    $region15: #{tpu_custom_call.1} parent=1 // pred_check_branch
      %38 = sbr.rel (0) target = $region17
    $region16: #{tpu_custom_call.1} parent=1 // pred_region
      %39 = dma.done [#allocation3], 128
    $region17: #{tpu_custom_call.1} parent=1 // pred_fallthru
      _
    // Predicated region
    $region18: #{tpu_custom_call.1} parent=1 // pred_check
      _
    $region19: #{tpu_custom_call.1} parent=1 // pred_check_branch
      %41 = sbr.rel (0) target = $region21
    $region20: #{tpu_custom_call.1} parent=1 // pred_region
      %42 = dma.done [#allocation6], 512
    $region21: #{tpu_custom_call.1} parent=1 // pred_fallthru
      _
    %v44 = vld [vmem:[#allocation2] sm:$0xf]
    %v45 = vld [vmem:[#allocation2 + $0x4] sm:$0xf]
    %v46 = vld [vmem:[#allocation5] sm:$0xf]
    %v47 = vld [vmem:[#allocation5 + $0x4] sm:$0xf]
    %v48 = vld [vmem:[#allocation5 + $0x8] sm:$0xf]
    %v49 = vld [vmem:[#allocation5 + $0xc] sm:$0xf]
    %v50 = vld [vmem:[#allocation5 + $0x10] sm:$0xf]
    %v51 = vld [vmem:[#allocation5 + $0x14] sm:$0xf]
    %v52 = vld [vmem:[#allocation5 + $0x18] sm:$0xf]
    %v53 = vld [vmem:[#allocation5 + $0x1c] sm:$0xf]
    %v54 = vld [vmem:[%s2] sm:$0x1]
    %v56 = vlaneseq
    %v57 = vshrl.u32 %v56, 7
    %v58 = vsub.s32 0, %v57
    %v59 = vrot.slane %v54, %v58
    %v63 = vunpack.c.l.b16 %v44
    %v64 = vunpack.c.l.b16 %v45
    %v65 = vpack.c.b16 %v64, %v63
    %v74 = vunpack.c.l.b16 %v46
    %v75 = vunpack.c.l.b16 %v47
    %v76 = vunpack.c.l.b16 %v48
    %v77 = vunpack.c.l.b16 %v49
    %v78 = vunpack.c.l.b16 %v50
    %v79 = vunpack.c.l.b16 %v51
    %v80 = vunpack.c.l.b16 %v52
    %v81 = vunpack.c.l.b16 %v53
    %v82 = vpack.c.b16 %v75, %v74
    %v83 = vpack.c.b16 %v77, %v76
    %v84 = vpack.c.b16 %v79, %v78
    %v85 = vpack.c.b16 %v81, %v80
    %vm90 = vcmask 523264
    %v92 = vsel %vm90, %v65, 0
    %94 = vmatprep.subr.bf16.mxu0 0
    %95 = vmatpush1.bf16.msra.mxu0 %v82
    %96 = vmatprep.subr.bf16.mxu0 0
    %97 = vmatpush1.bf16.msra.mxu0 %v83
    %98 = vmatprep.subr.bf16.mxu0 0
    %99 = vmatpush1.bf16.msra.mxu0 %v84
    %100 = vmatprep.subr.bf16.mxu0 0
    %101 = vmatpush1.bf16.msra.mxu0 %v85
    %102 = vmatprep.subr.bf16.mxu0 0
    %103 = vmatpush1.bf16.msra.mxu0 0
    %104 = vmatprep.subr.bf16.mxu0 0
    %105 = vmatpush1.bf16.msra.mxu0 0
    %106 = vmatprep.subr.bf16.mxu0 0
    %107 = vmatpush1.bf16.msra.mxu0 0
    %108 = vmatprep.subr.bf16.mxu0 0
    %109 = vmatpush1.bf16.msra.mxu0 0
    %110 = vmatprep.subr.bf16.mxu0 0
    %111 = vmatpush1.bf16.msra.mxu0 0
    %112 = vmatprep.subr.bf16.mxu0 0
    %113 = vmatpush1.bf16.msra.mxu0 0
    %114 = vmatprep.subr.bf16.mxu0 0
    %115 = vmatpush1.bf16.msra.mxu0 0
    %116 = vmatprep.subr.bf16.mxu0 0
    %117 = vmatpush1.bf16.msra.mxu0 0
    %118 = vmatprep.subr.bf16.mxu0 0
    %119 = vmatpush1.bf16.msra.mxu0 0
    %120 = vmatprep.subr.bf16.mxu0 0
    %121 = vmatpush1.bf16.msra.mxu0 0
    %122 = vmatprep.subr.bf16.mxu0 0
    %123 = vmatpush1.bf16.msra.mxu0 0
    %124 = vmatprep.subr.bf16.mxu0 0
    %125 = vmatpush1.bf16.msra.mxu0 0
    %126 = vmatprep.mubr.bf16.mxu0 0
    %127 = vmatmul.mubr.bf16.gmra.mrb[0].mxu0 %v92
    %v128 = vpop.f32.mrb[0].mxu0
    %v129 = vadd.f32 %v59, %v128
    %v130 = vpop.f32.mrb[0].mxu0
    %v131 = vpop.f32.mrb[0].mxu0
    %v132 = vadd.f32 %v59, %v131
    %v133 = vpop.f32.mrb[0].mxu0
    %134 = vdwg.mxu0
    %v135 = vpack.c.bf16 %v129, %v129
    %v136 = vpack.c.bf16 %v132, %v132
    %138 = vrot.lane.b32.xlu0 %v135, 96
    %v139 = vpop.permute.xlu0 %138
    %vm140 = vcmask 261120
    %v142 = vsel %vm140, %v135, 0
    %v145 = vsel %vm140, %v139, 0
    %147 = vmatprep.subr.bf16.mxu0 0
    %148 = vmatpush1.bf16.xpose.msra.mxu0 %v145
    %149 = vmatprep.subr.bf16.mxu0 0
    %150 = vmatpush1.bf16.xpose.msra.mxu0 0
    %151 = vmatprep.subr.bf16.mxu0 0
    %152 = vmatpush1.bf16.xpose.msra.mxu0 0
    %153 = vmatprep.subr.bf16.mxu0 0
    %154 = vmatpush1.bf16.xpose.msra.mxu0 0
    %155 = vmatprep.subr.bf16.mxu0 0
    %156 = vmatpush1.bf16.xpose.msra.mxu0 0
    %157 = vmatprep.subr.bf16.mxu0 0
    %158 = vmatpush1.bf16.xpose.msra.mxu0 0
    %159 = vmatprep.subr.bf16.mxu0 0
    %160 = vmatpush1.bf16.xpose.msra.mxu0 0
    %161 = vmatprep.subr.bf16.mxu0 0
    %162 = vmatpush1.bf16.xpose.msra.mxu0 0
    %163 = vmatprep.subr.bf16.mxu0 0
    %164 = vmatpush1.bf16.xpose.msra.mxu0 0
    %165 = vmatprep.subr.bf16.mxu0 0
    %166 = vmatpush1.bf16.xpose.msra.mxu0 0
    %167 = vmatprep.subr.bf16.mxu0 0
    %168 = vmatpush1.bf16.xpose.msra.mxu0 0
    %169 = vmatprep.subr.bf16.mxu0 0
    %170 = vmatpush1.bf16.xpose.msra.mxu0 0
    %171 = vmatprep.subr.bf16.mxu0 0
    %172 = vmatpush1.bf16.xpose.msra.mxu0 0
    %173 = vmatprep.subr.bf16.mxu0 0
    %174 = vmatpush1.bf16.xpose.msra.mxu0 0
    %175 = vmatprep.subr.bf16.mxu0 0
    %176 = vmatpush1.bf16.xpose.msra.mxu0 0
    %177 = vmatprep.subr.bf16.mxu0 0
    %178 = vmatpush1.bf16.xpose.msra.mxu0 0
    %179 = vmatprep.mubr.bf16.mxu0 0
    %180 = vmatmul.mubr.bf16.gmra.mrb[0].mxu0 %v142
    %v181 = vpop.f32.mrb[0].mxu0
    %v182 = vadd.f32 0.0, %v181
    %v183 = vpop.f32.mrb[0].mxu0
    %v184 = vpop.f32.mrb[0].mxu0
    %v185 = vpop.f32.mrb[0].mxu0
    %186 = vdwg.mxu0
    %188 = vrot.lane.b32.xlu0 %v136, 96
    %v189 = vpop.permute.xlu0 %188
    %v191 = vsel %vm140, %v136, 0
    %v194 = vsel %vm140, %v189, 0
    %196 = vmatprep.subr.bf16.mxu0 0
    %197 = vmatpush1.bf16.xpose.msra.mxu0 %v194
    %198 = vmatprep.subr.bf16.mxu0 0
    %199 = vmatpush1.bf16.xpose.msra.mxu0 0
    %200 = vmatprep.subr.bf16.mxu0 0
    %201 = vmatpush1.bf16.xpose.msra.mxu0 0
    %202 = vmatprep.subr.bf16.mxu0 0
    %203 = vmatpush1.bf16.xpose.msra.mxu0 0
    %204 = vmatprep.subr.bf16.mxu0 0
    %205 = vmatpush1.bf16.xpose.msra.mxu0 0
    %206 = vmatprep.subr.bf16.mxu0 0
    %207 = vmatpush1.bf16.xpose.msra.mxu0 0
    %208 = vmatprep.subr.bf16.mxu0 0
    %209 = vmatpush1.bf16.xpose.msra.mxu0 0
    %210 = vmatprep.subr.bf16.mxu0 0
    %211 = vmatpush1.bf16.xpose.msra.mxu0 0
    %212 = vmatprep.subr.bf16.mxu0 0
    %213 = vmatpush1.bf16.xpose.msra.mxu0 0
    %214 = vmatprep.subr.bf16.mxu0 0
    %215 = vmatpush1.bf16.xpose.msra.mxu0 0
    %216 = vmatprep.subr.bf16.mxu0 0
    %217 = vmatpush1.bf16.xpose.msra.mxu0 0
    %218 = vmatprep.subr.bf16.mxu0 0
    %219 = vmatpush1.bf16.xpose.msra.mxu0 0
    %220 = vmatprep.subr.bf16.mxu0 0
    %221 = vmatpush1.bf16.xpose.msra.mxu0 0
    %222 = vmatprep.subr.bf16.mxu0 0
    %223 = vmatpush1.bf16.xpose.msra.mxu0 0
    %224 = vmatprep.subr.bf16.mxu0 0
    %225 = vmatpush1.bf16.xpose.msra.mxu0 0
    %226 = vmatprep.subr.bf16.mxu0 0
    %227 = vmatpush1.bf16.xpose.msra.mxu0 0
    %228 = vmatprep.mubr.bf16.mxu0 0
    %229 = vmatmul.mubr.bf16.gmra.mrb[0].mxu0 %v191
    %v230 = vpop.f32.mrb[0].mxu0
    %v231 = vadd.f32 0.0, %v230
    %v232 = vpop.f32.mrb[0].mxu0
    %v233 = vpop.f32.mrb[0].mxu0
    %v234 = vpop.f32.mrb[0].mxu0
    %235 = vdwg.mxu0
    %vm236 = vcmask 64512
    %v237 = vsel %vm236, %v182, -inf
    %238 = vmax.xlane.f32.xlu0 %v237
    %v239 = vpop.xlane.xlu0 %238
    %v240 = vsel %vm236, %v231, -inf
    %241 = vmax.xlane.f32.xlu0 %v240
    %v242 = vpop.xlane.xlu0 %241
    %v243 = vsub.f32 %v182, %v239
    %v244 = vsub.f32 %v231, %v242
    %v245 = vmul.f32 %v243, 1.442695
    %v246 = vpow.pop %v245
    %v247 = vmul.f32 %v244, 1.442695
    %v248 = vpow.pop %v247
    %v249 = vsel %vm236, %v246, 0.0
    %250 = vadd.xlane.f32.xlu0 %v249
    %v251 = vpop.xlane.xlu0 %250
    %v252 = vsel %vm236, %v248, 0.0
    %253 = vadd.xlane.f32.xlu0 %v252
    %v254 = vpop.xlane.xlu0 %253
    %v255 = vrcp.pop %v251
    %v256 = vrcp.pop %v254
    %v257 = vmul.f32 %v246, %v255
    %v258 = vmul.f32 %v248, %v256
    %v259 = vpack.c.bf16 %v257, %v257
    %v260 = vpack.c.bf16 %v258, %v258
    %261 = vrot.lane.b32.xlu0 %v135, 64
    %v262 = vpop.permute.xlu0 %261
    %v264 = vsel %vm236, %v259, 0
    %vm266 = vcmask 1043456
    %v268 = vsel %vm266, %v262, 0
    %270 = vmatprep.subr.bf16.mxu0 0
    %271 = vmatpush1.bf16.msra.mxu0 %v268
    %272 = vmatprep.subr.bf16.mxu0 0
    %273 = vmatpush1.bf16.msra.mxu0 0
    %274 = vmatprep.subr.bf16.mxu0 0
    %275 = vmatpush1.bf16.msra.mxu0 0
    %276 = vmatprep.subr.bf16.mxu0 0
    %277 = vmatpush1.bf16.msra.mxu0 0
    %278 = vmatprep.subr.bf16.mxu0 0
    %279 = vmatpush1.bf16.msra.mxu0 0
    %280 = vmatprep.subr.bf16.mxu0 0
    %281 = vmatpush1.bf16.msra.mxu0 0
    %282 = vmatprep.subr.bf16.mxu0 0
    %283 = vmatpush1.bf16.msra.mxu0 0
    %284 = vmatprep.subr.bf16.mxu0 0
    %285 = vmatpush1.bf16.msra.mxu0 0
    %286 = vmatprep.subr.bf16.mxu0 0
    %287 = vmatpush1.bf16.msra.mxu0 0
    %288 = vmatprep.subr.bf16.mxu0 0
    %289 = vmatpush1.bf16.msra.mxu0 0
    %290 = vmatprep.subr.bf16.mxu0 0
    %291 = vmatpush1.bf16.msra.mxu0 0
    %292 = vmatprep.subr.bf16.mxu0 0
    %293 = vmatpush1.bf16.msra.mxu0 0
    %294 = vmatprep.subr.bf16.mxu0 0
    %295 = vmatpush1.bf16.msra.mxu0 0
    %296 = vmatprep.subr.bf16.mxu0 0
    %297 = vmatpush1.bf16.msra.mxu0 0
    %298 = vmatprep.subr.bf16.mxu0 0
    %299 = vmatpush1.bf16.msra.mxu0 0
    %300 = vmatprep.subr.bf16.mxu0 0
    %301 = vmatpush1.bf16.msra.mxu0 0
    %302 = vmatprep.mubr.bf16.mxu0 0
    %303 = vmatmul.mubr.bf16.gmra.mrb[0].mxu0 %v264
    %v304 = vpop.f32.mrb[0].mxu0
    %v305 = vadd.f32 0.0, %v304
    %v306 = vpop.f32.mrb[0].mxu0
    %v307 = vpop.f32.mrb[0].mxu0
    %v308 = vpop.f32.mrb[0].mxu0
    %309 = vdwg.mxu0
    %310 = vrot.lane.b32.xlu0 %v136, 64
    %v311 = vpop.permute.xlu0 %310
    %v313 = vsel %vm236, %v260, 0
    %v316 = vsel %vm266, %v311, 0
    %318 = vmatprep.subr.bf16.mxu0 0
    %319 = vmatpush1.bf16.msra.mxu0 %v316
    %320 = vmatprep.subr.bf16.mxu0 0
    %321 = vmatpush1.bf16.msra.mxu0 0
    %322 = vmatprep.subr.bf16.mxu0 0
    %323 = vmatpush1.bf16.msra.mxu0 0
    %324 = vmatprep.subr.bf16.mxu0 0
    %325 = vmatpush1.bf16.msra.mxu0 0
    %326 = vmatprep.subr.bf16.mxu0 0
    %327 = vmatpush1.bf16.msra.mxu0 0
    %328 = vmatprep.subr.bf16.mxu0 0
    %329 = vmatpush1.bf16.msra.mxu0 0
    %330 = vmatprep.subr.bf16.mxu0 0
    %331 = vmatpush1.bf16.msra.mxu0 0
    %332 = vmatprep.subr.bf16.mxu0 0
    %333 = vmatpush1.bf16.msra.mxu0 0
    %334 = vmatprep.subr.bf16.mxu0 0
    %335 = vmatpush1.bf16.msra.mxu0 0
    %336 = vmatprep.subr.bf16.mxu0 0
    %337 = vmatpush1.bf16.msra.mxu0 0
    %338 = vmatprep.subr.bf16.mxu0 0
    %339 = vmatpush1.bf16.msra.mxu0 0
    %340 = vmatprep.subr.bf16.mxu0 0
    %341 = vmatpush1.bf16.msra.mxu0 0
    %342 = vmatprep.subr.bf16.mxu0 0
    %343 = vmatpush1.bf16.msra.mxu0 0
    %344 = vmatprep.subr.bf16.mxu0 0
    %345 = vmatpush1.bf16.msra.mxu0 0
    %346 = vmatprep.subr.bf16.mxu0 0
    %347 = vmatpush1.bf16.msra.mxu0 0
    %348 = vmatprep.subr.bf16.mxu0 0
    %349 = vmatpush1.bf16.msra.mxu0 0
    %350 = vmatprep.mubr.bf16.mxu0 0
    %351 = vmatmul.mubr.bf16.gmra.mrb[0].mxu0 %v313
    %v352 = vpop.f32.mrb[0].mxu0
    %v353 = vadd.f32 0.0, %v352
    %v354 = vpop.f32.mrb[0].mxu0
    %v355 = vpop.f32.mrb[0].mxu0
    %v356 = vpop.f32.mrb[0].mxu0
    %357 = vdwg.mxu0
    %v358 = vcombine.high %v305, 0.0
    %v360 = vunpack.c.l.s4 1983009808
    %v361 = vunpack.c.0.s8 %v360
    %v362 = vlaneseq
    %v363 = vshrl.u32 %v362, 7
    %v364 = vsub.s32 %v361, %v363
    %v365 = vrot.slane %v305, %v364
    %v367 = vunpack.c.l.s4 1983009808
    %v368 = vunpack.c.0.s8 %v367
    %v369 = vlaneseq
    %v370 = vshrl.u32 %v369, 7
    %v371 = vsub.s32 %v368, %v370
    %v372 = vrot.slane %v358, %v371
    %v373 = vcombine.high %v353, 0.0
    %v375 = vunpack.c.l.s4 1983009808
    %v376 = vunpack.c.0.s8 %v375
    %v377 = vlaneseq
    %v378 = vshrl.u32 %v377, 7
    %v379 = vsub.s32 %v376, %v378
    %v380 = vrot.slane %v353, %v379
    %v382 = vunpack.c.l.s4 1983009808
    %v383 = vunpack.c.0.s8 %v382
    %v384 = vlaneseq
    %v385 = vshrl.u32 %v384, 7
    %v386 = vsub.s32 %v383, %v385
    %v387 = vrot.slane %v373, %v386
    %v388 = vcombine.low %v365, %v380
    %v389 = vcombine.high %v365, %v380
    %v391 = vunpack.c.l.s4 1934713408
    %v392 = vunpack.c.0.s8 %v391
    %v393 = vlaneseq
    %v394 = vshrl.u32 %v393, 7
    %v395 = vsub.s32 %v392, %v394
    %v396 = vrot.slane %v388, %v395
    %v398 = vunpack.c.l.s4 1934713408
    %v399 = vunpack.c.0.s8 %v398
    %v400 = vlaneseq
    %v401 = vshrl.u32 %v400, 7
    %v402 = vsub.s32 %v399, %v401
    %v403 = vrot.slane %v389, %v402
    %v404 = vcombine.low %v372, %v387
    %v405 = vcombine.high %v372, %v387
    %v407 = vunpack.c.l.s4 1934713408
    %v408 = vunpack.c.0.s8 %v407
    %v409 = vlaneseq
    %v410 = vshrl.u32 %v409, 7
    %v411 = vsub.s32 %v408, %v410
    %v412 = vrot.slane %v404, %v411
    %v414 = vunpack.c.l.s4 1934713408
    %v415 = vunpack.c.0.s8 %v414
    %v416 = vlaneseq
    %v417 = vshrl.u32 %v416, 7
    %v418 = vsub.s32 %v415, %v417
    %v419 = vrot.slane %v405, %v418
    %v420 = vcombine.high %v396, 0.0
    %v421 = vcombine.high %v403, 0.0
    %v422 = vcombine.high %v412, 0.0
    %v423 = vcombine.high %v419, 0.0
    %425 = vrot.lane.b32.xlu0 %v420, 32
    %v426 = vpop.permute.xlu0 %425
    %429 = vrot.lane.b32.xlu0 %v403, 64
    %v430 = vpop.permute.xlu0 %429
    %433 = vrot.lane.b32.xlu0 %v421, 96
    %v434 = vpop.permute.xlu0 %433
    %437 = vrot.lane.b32.xlu0 %v422, 32
    %v438 = vpop.permute.xlu0 %437
    %441 = vrot.lane.b32.xlu0 %v419, 64
    %v442 = vpop.permute.xlu0 %441
    %445 = vrot.lane.b32.xlu0 %v423, 96
    %v446 = vpop.permute.xlu0 %445
    %v448 = vsel %vm140, %v396, %v426
    %v449 = vsel %vm90, %v448, %v430
    %vm450 = vcmask 785408
    %v451 = vsel %vm450, %v449, %v434
    %v452 = vsel %vm140, %v412, %v438
    %v453 = vsel %vm90, %v452, %v442
    %v454 = vsel %vm450, %v453, %v446
    %v457 = vcombine.low %v451, %v454
    %v459 = vunpack.c.l.s4 1983009808
    %v460 = vunpack.c.0.s8 %v459
    %v461 = vlaneseq
    %v462 = vshrl.u32 %v461, 7
    %v463 = vsub.s32 %v460, %v462
    %v464 = vrot.slane %v457, %v463
    %466 = vst [vmem:[#allocation7] sm:$0xf] %v464
    // Predicated region
    $region22: #{tpu_custom_call.1} parent=1 // pred_check
      _
    $region23: #{tpu_custom_call.1} parent=1 // pred_check_branch
      %468 = sbr.rel (0) target = $region25
    $region24: #{tpu_custom_call.1} parent=1 // pred_region
      %s470 = ssub.s32 64, 64
      %471 = vsyncadd [#allocation4], %s470
      %s473 = sshll.u32 [#allocation7], 4
      %s474 = int_to_ptr.vmem [resolvable:$true] %s473
      %476 = dma.vmem_to_hbm [thread:$0]  %s474, 64, %s3, [#allocation4]
    $region25: #{tpu_custom_call.1} parent=1 // pred_fallthru
      _
    // Predicated region
    $region26: #{tpu_custom_call.1} parent=1 // pred_check
      _
    $region27: #{tpu_custom_call.1} parent=1 // pred_check_branch
      %478 = sbr.rel (0) target = $region29
    $region28: #{tpu_custom_call.1} parent=1 // pred_region
      %479 = dma.done [#allocation4], 64
    $region29: #{tpu_custom_call.1} parent=1 // pred_fallthru
      _
    %480 = vsyncpa [#allocation3], 1
    %481 = vsyncpa [#allocation6], 1
    %482 = vsyncpa [#allocation4], 1

</llo_original>
